<compile_context>
chip_gen: v5e
topology: v5e:2x2
jax: 0.10.0
libtpu: 0.0.40
codegen_flags: <defaults>
</compile_context>

<pallas_src>
import functools
import math

import jax
import jax.numpy as jnp
from jax.experimental import pallas as pl
from jax.experimental.pallas import tpu as pltpu


def _round_up(x, m):
    return ((x + m - 1) // m) * m


def _conv1d_kernel(x_ref, w_ref, b_ref, o_ref, acc_ref):
    # x_ref: (tm, tk)  w_ref: (tk, tn)  b_ref: (1, tn)  o_ref: (tm, tn)
    k = pl.program_id(2)

    @pl.when(k == 0)
    def _():
        acc_ref[...] = jnp.zeros_like(acc_ref)

    # MXU matmul, f32 accumulation; operands stay in their input dtype.
    acc_ref[...] += jnp.dot(x_ref[...], w_ref[...],
                            preferred_element_type=jnp.float32)

    @pl.when(k == pl.num_programs(2) - 1)
    def _():
        o_ref[...] = (acc_ref[...]
                      + b_ref[...].astype(jnp.float32)).astype(o_ref.dtype)


@functools.partial(jax.jit, static_argnames=("tm", "tn", "tk"))
def conv1d_forward(x, w, b, *, tm=256, tn=256, tk=512):
    """Conv1D forward: x: [..., nx]; w: [nx, nf]; b: [nf] -> [..., nf]."""
    *lead, nx = x.shape
    nf = w.shape[1]
    M = math.prod(lead) if lead else 1

    # Clamp tiles to the (8,128)-aligned, padded problem dims.
    tm = min(tm, _round_up(M, 8))
    tn = min(tn, _round_up(nf, 128))
    tk = min(tk, _round_up(nx, 128))

    Mp, Np, Kp = _round_up(M, tm), _round_up(nf, tn), _round_up(nx, tk)

    x2 = x.reshape(M, nx)
    if (Mp, Kp) != (M, nx):
        x2 = jnp.pad(x2, ((0, Mp - M), (0, Kp - nx)))
    wp = w if (Kp, Np) == (nx, nf) else jnp.pad(w, ((0, Kp - nx), (0, Np - nf)))
    bp = b if Np == nf else jnp.pad(b, (0, Np - nf))
    bp = bp.reshape(1, Np)

    grid = (Mp // tm, Np // tn, Kp // tk)

    cost = pl.CostEstimate(
        flops=2 * M * nx * nf,
        transcendentals=0,
        bytes_accessed=(x2.size * x2.dtype.itemsize
                        + wp.size * wp.dtype.itemsize
                        + bp.size * bp.dtype.itemsize
                        + Mp * Np * x.dtype.itemsize),
    )

    out = pl.pallas_call(
        _conv1d_kernel,
        out_shape=jax.ShapeDtypeStruct((Mp, Np), x.dtype),
        grid_spec=pltpu.PrefetchScalarGridSpec(
            num_scalar_prefetch=0,
            grid=grid,
            in_specs=[
                pl.BlockSpec((tm, tk), lambda i, j, k: (i, k)),  # x tile
                pl.BlockSpec((tk, tn), lambda i, j, k: (k, j)),  # W tile
                pl.BlockSpec((1, tn), lambda i, j, k: (0, j)),   # bias tile
            ],
            out_specs=pl.BlockSpec((tm, tn), lambda i, j, k: (i, j)),
            scratch_shapes=[pltpu.VMEM((tm, tn), jnp.float32)],
        ),
        compiler_params=pltpu.CompilerParams(
            dimension_semantics=("parallel", "parallel", "arbitrary")),
        cost_estimate=cost,
    )(x2, wp, bp)

    return out[:M, :nf].reshape(*lead, nf)


def conv1d_reference(x, w, b):
    return jnp.einsum("...c,cf->...f", x, w) + b


if __name__ == "__main__":
    # Small shapes consistent with a GPT-2 attention Conv1D (c_attn-style):
    # x: [B, T, n_embd], weight: [n_embd, nf], bias: [nf].
    B, T, n_embd = 2, 8, 128
    nf = 3 * n_embd  # 384 (lane-dense: multiple of 128)

    key = jax.random.PRNGKey(0)
    kx, kw, kb = jax.random.split(key, 3)

    x = jax.random.normal(kx, (B, T, n_embd), dtype=jnp.float32)
    # Conv1D init: weight ~ N(0, 0.02); bias is zeros in the module, but use a
    # small nonzero bias here so the bias-add path is actually exercised.
    w = 0.02 * jax.random.normal(kw, (n_embd, nf), dtype=jnp.float32)
    b = 0.01 * jax.random.normal(kb, (nf,), dtype=jnp.float32)

    out = conv1d_forward(x, w, b)
    jax.block_until_ready(out)

    ref = conv1d_reference(x, w, b)
    assert out.shape == (B, T, nf)
    assert jnp.allclose(out, ref, atol=1e-5, rtol=1e-5)

    print("KERNEL_OK")
</pallas_src>

<mosaic_0001>
module attributes {stable_mosaic.version = 11 : i64} {
  func.func @_conv1d_kernel(%arg0: i32, %arg1: i32, %arg2: i32, %arg3: memref<16x128xf32, #tpu.memory_space<vmem>>, %arg4: memref<128x256xf32, #tpu.memory_space<vmem>>, %arg5: memref<1x256xf32, #tpu.memory_space<vmem>>, %arg6: memref<16x256xf32, #tpu.memory_space<vmem>>, %arg7: memref<16x256xf32, #tpu.memory_space<vmem>>) attributes {dimension_semantics = [#tpu.dimension_semantics<parallel>, #tpu.dimension_semantics<parallel>, #tpu.dimension_semantics<arbitrary>], iteration_bounds = array<i64: 1, 2, 1>, scalar_prefetch = 0 : i64, scratch_operands = 1 : i64, tpu.core_type = #tpu.core_type<tc>, window_params = [{transform_indices = @transform_0, window_bounds = array<i64: 16, 128>}, {transform_indices = @transform_1, window_bounds = array<i64: 128, 256>}, {transform_indices = @transform_2, window_bounds = array<i64: 1, 256>}, {transform_indices = @transform_3, window_bounds = array<i64: 16, 256>}]} {
    %c0_i32 = arith.constant 0 : i32
    %0 = arith.cmpi eq, %arg2, %c0_i32 : i32
    %1 = arith.extui %0 : i1 to i32
    %c0_i32_0 = arith.constant 0 : i32
    %2 = arith.cmpi ne, %1, %c0_i32_0 : i32
    scf.if %2 {
      %cst_10 = arith.constant 0.000000e+00 : f32
      %12 = vector.broadcast %cst_10 : f32 to vector<16x256xf32>
      %c0_11 = arith.constant 0 : index
      %c0_12 = arith.constant 0 : index
      %13 = vector.load %arg7[%c0_11, %c0_12] : memref<16x256xf32, #tpu.memory_space<vmem>>, vector<16x256xf32>
      tpu.vector_store %arg7[%c0_11, %c0_12], %12 {strides = array<i32>} : memref<16x256xf32, #tpu.memory_space<vmem>>, vector<16x256xf32>,
    } else {
    }
    %c0 = arith.constant 0 : index
    %c0_1 = arith.constant 0 : index
    %3 = vector.load %arg7[%c0, %c0_1] : memref<16x256xf32, #tpu.memory_space<vmem>>, vector<16x256xf32>
    %c0_2 = arith.constant 0 : index
    %c0_3 = arith.constant 0 : index
    %4 = vector.load %arg3[%c0_2, %c0_3] : memref<16x128xf32, #tpu.memory_space<vmem>>, vector<16x128xf32>
    %c0_4 = arith.constant 0 : index
    %c0_5 = arith.constant 0 : index
    %5 = vector.load %arg4[%c0_4, %c0_5] : memref<128x256xf32, #tpu.memory_space<vmem>>, vector<128x256xf32>
    %cst = arith.constant dense<0.000000e+00> : vector<16x256xf32>
    %6 = tpu.matmul %4, %5, %cst {dimension_numbers = #tpu.dot_dimension_numbers<[1], [0], [0], [1], [0, 0, 1, 1], [], []>} : vector<16x128xf32>, vector<128x256xf32>, vector<16x256xf32> -> vector<16x256xf32>
    %7 = arith.addf %3, %6 : vector<16x256xf32>
    %c0_6 = arith.constant 0 : index
    %c0_7 = arith.constant 0 : index
    %8 = vector.load %arg7[%c0_6, %c0_7] : memref<16x256xf32, #tpu.memory_space<vmem>>, vector<16x256xf32>
    tpu.vector_store %arg7[%c0_6, %c0_7], %7 {strides = array<i32>} : memref<16x256xf32, #tpu.memory_space<vmem>>, vector<16x256xf32>,
    %c0_i32_8 = arith.constant 0 : i32
    %9 = arith.cmpi eq, %arg2, %c0_i32_8 : i32
    %10 = arith.extui %9 : i1 to i32
    %c0_i32_9 = arith.constant 0 : i32
    %11 = arith.cmpi ne, %10, %c0_i32_9 : i32
    scf.if %11 {
      %c0_10 = arith.constant 0 : index
      %c0_11 = arith.constant 0 : index
      %12 = vector.load %arg7[%c0_10, %c0_11] : memref<16x256xf32, #tpu.memory_space<vmem>>, vector<16x256xf32>
      %c0_12 = arith.constant 0 : index
      %c0_13 = arith.constant 0 : index
      %13 = vector.load %arg5[%c0_12, %c0_13] : memref<1x256xf32, #tpu.memory_space<vmem>>, vector<1x256xf32>
      %14 = vector.broadcast %13 : vector<1x256xf32> to vector<16x256xf32>
      %15 = arith.addf %12, %14 : vector<16x256xf32>
      %c0_14 = arith.constant 0 : index
      %c0_15 = arith.constant 0 : index
      %16 = vector.load %arg6[%c0_14, %c0_15] : memref<16x256xf32, #tpu.memory_space<vmem>>, vector<16x256xf32>
      tpu.vector_store %arg6[%c0_14, %c0_15], %15 {strides = array<i32>} : memref<16x256xf32, #tpu.memory_space<vmem>>, vector<16x256xf32>,
    } else {
    }
    return
  }
  func.func @transform_0(%arg0: i32, %arg1: i32, %arg2: i32) -> (i32, i32) {
    %c0_i32 = arith.constant 0 : i32
    return %arg0, %arg2 : i32, i32
  }
  func.func @transform_1(%arg0: i32, %arg1: i32, %arg2: i32) -> (i32, i32) {
    %c0_i32 = arith.constant 0 : i32
    return %arg2, %arg1 : i32, i32
  }
  func.func @transform_2(%arg0: i32, %arg1: i32, %arg2: i32) -> (i32, i32) {
    %c0_i32 = arith.constant 0 : i32
    %c0_i32_0 = arith.constant 0 : i32
    return %c0_i32, %arg1 : i32, i32
  }
  func.func @transform_3(%arg0: i32, %arg1: i32, %arg2: i32) -> (i32, i32) {
    %c0_i32 = arith.constant 0 : i32
    return %arg0, %arg1 : i32, i32
  }
}

</mosaic_0001>

<llo_original>
// kernel: conv1d_forward.1
$region0: #{conv1d_forward.1}
  #allocation0 [shape = 'u32[]', space=smem, size = 0x4, offset = 0x4, fixed_abs, tag = 'smem constant byte address 0x4 - core index']
  #allocation1 [shape = 'u32[72,128]{1,0:T(1,128)}', space=vmem, size = 0x9000, scoped, tag = 'internal scratch']
  #allocation2 [shape = 'f32[16,256]{1,0:T(8,128)}', space=vmem, size = 0x4000, scoped, tag = 'scratch operand']
  %s0 = inlined_call_operand.vmem [shape: f32[16,128], index: 0, kind: input, shape index: {}]
  %s1 = inlined_call_operand.vmem [shape: f32[128,512], index: 1, kind: input, shape index: {}]
  %s2 = inlined_call_operand.vmem [shape: f32[1,512], index: 2, kind: input, shape index: {}]
  %s3 = inlined_call_operand.vmem [shape: f32[16,512], index: 3, kind: output, shape index: {}]
  %s4 = sld [smem:[#allocation0]]
  $region95: #{conv1d_forward.1} parent=0
    _
  %s6 = ssub.s32 1, %s4
  %s7 = scalar_select 0, %s6, %s4
  $region1: #{conv1d_forward.1} parent=0
    #allocation3 [shape = 'u8[262144]{0}', space=vmem, size = 0x40000, scoped, tag = 'input window, operand 1']
    #allocation4 [shape = 'u8[32768]{0}', space=vmem, size = 0x8000, scoped, tag = 'output window, operand 0']
    loop: start=0, step=1, limit=4
    $region2: #{conv1d_forward.1} parent=1 // loop_pre_header
      _
    $region3: #{conv1d_forward.1} parent=1 // loop_header
      %s9 = sphi 0, %s13
      %p10 = scmp.ge.s32.totalorder %s9, 4
      %s16 = sphi 0, %s35
      %s17 = sphi 0, %s31
      %s18 = sphi 0, %s27
      %s19 = sphi 0, %s16
      %s20 = sphi 0, %s17
      %s21 = sphi 0, %s18
      %s22 = sphi 0, %s19
      %s23 = sphi 0, %s20
      %s24 = sphi 0, %s21
      %s40 = sphi 0, %s42
      %s43 = sphi 0, %s40
      %s44 = sphi 0, %s43
      %s60 = sphi 0, %s44
      %s68 = sphi 0, %s70
      %s71 = sphi 0, %s68
      %s72 = sphi 0, %s71
      %s88 = sphi 0, %s72
      %s94 = sphi 0, %s96
      %s97 = sphi 0, %s94
      %s98 = sphi 0, %s97
      %s114 = sphi 0, %s98
      %s122 = sphi 0, %s124
      %s125 = sphi 0, %s122
      %s126 = sphi 0, %s125
      %s142 = sphi 0, %s126
    $region4: #{conv1d_forward.1} parent=1 // loop_header_branch
      %12 = sbr.rel (%p10) target = $region8
    $region5: #{conv1d_forward.1} parent=1 // loop_body
      %s14 = ssub.s32 %s9, 1
      %s15 = ssub.s32 %s9, 2
      %s25 = sadd.s32 1, %s18
      %p26 = scmp.ge.s32.totalorder %s25, 1
      %s27 = scalar_select %p26, 0, %s25
      %s28 = sadd.s32 1, %s17
      %s29 = scalar_select %p26, %s28, %s17
      %p30 = scmp.ge.s32.totalorder %s29, 2
      %s31 = scalar_select %p30, 0, %s29
      %s32 = sadd.s32 1, %s16
      %s33 = scalar_select %p30, %s32, %s16
      %p34 = scmp.ge.s32.totalorder %s33, 1
      %s35 = scalar_select %p34, 0, %s33
      %s36 = ssub.s32 %s16, %s35
      %s37 = ssub.s32 %s18, %s27
      %s38 = sor.u32 %s36, %s37
      %p39 = scmp.eq.s32.totalorder %s38, 0
      %s41 = sadd.s32 %s40, 1
      %s42 = scalar_select %p39, %s40, %s41
      %p45 = pneg %p39
      %p46 = scmp.eq.s32.totalorder %s9, 1
      %p47 = por %p45, %p46
      %p48 = scmp.ne.s32.totalorder %s40, %s43
      %p49 = scmp.eq.s32.totalorder %s9, 0
      %p50 = por %p48, %p49
      %p51 = scmp.ne.s32.totalorder %s40, %s43
      %p52 = scmp.eq.s32.totalorder %s14, 1
      %p53 = por %p51, %p52
      %p54 = scmp.ne.s32.totalorder %s43, %s44
      %p55 = scmp.eq.s32.totalorder %s14, 0
      %p56 = por %p54, %p55
      %p57 = scmp.ne.s32.totalorder %s43, %s44
      %p58 = scmp.eq.s32.totalorder %s15, 1
      %p59 = por %p57, %p58
      %p61 = scmp.ne.s32.totalorder %s44, %s60
      %p62 = scmp.eq.s32.totalorder %s15, 0
      %p63 = por %p61, %p62
      %s64 = ssub.s32 %s18, %s27
      %s65 = ssub.s32 %s17, %s31
      %s66 = sor.u32 %s64, %s65
      %p67 = scmp.eq.s32.totalorder %s66, 0
      %s69 = sadd.s32 %s68, 1
      %s70 = scalar_select %p67, %s68, %s69
      %p73 = pneg %p67
      %p74 = scmp.eq.s32.totalorder %s9, 1
      %p75 = por %p73, %p74
      %p76 = scmp.ne.s32.totalorder %s68, %s71
      %p77 = scmp.eq.s32.totalorder %s9, 0
      %p78 = por %p76, %p77
      %p79 = scmp.ne.s32.totalorder %s68, %s71
      %p80 = scmp.eq.s32.totalorder %s14, 1
      %p81 = por %p79, %p80
      %p82 = scmp.ne.s32.totalorder %s71, %s72
      %p83 = scmp.eq.s32.totalorder %s14, 0
      %p84 = por %p82, %p83
      %p85 = scmp.ne.s32.totalorder %s71, %s72
      %p86 = scmp.eq.s32.totalorder %s15, 1
      %p87 = por %p85, %p86
      %p89 = scmp.ne.s32.totalorder %s72, %s88
      %p90 = scmp.eq.s32.totalorder %s15, 0
      %p91 = por %p89, %p90
      %s92 = ssub.s32 %s17, %s31
      %p93 = scmp.eq.s32.totalorder %s92, 0
      %s95 = sadd.s32 %s94, 1
      %s96 = scalar_select %p93, %s94, %s95
      %p99 = pneg %p93
      %p100 = scmp.eq.s32.totalorder %s9, 1
      %p101 = por %p99, %p100
      %p102 = scmp.ne.s32.totalorder %s94, %s97
      %p103 = scmp.eq.s32.totalorder %s9, 0
      %p104 = por %p102, %p103
      %p105 = scmp.ne.s32.totalorder %s94, %s97
      %p106 = scmp.eq.s32.totalorder %s14, 1
      %p107 = por %p105, %p106
      %p108 = scmp.ne.s32.totalorder %s97, %s98
      %p109 = scmp.eq.s32.totalorder %s14, 0
      %p110 = por %p108, %p109
      %p111 = scmp.ne.s32.totalorder %s97, %s98
      %p112 = scmp.eq.s32.totalorder %s15, 1
      %p113 = por %p111, %p112
      %p115 = scmp.ne.s32.totalorder %s98, %s114
      %p116 = scmp.eq.s32.totalorder %s15, 0
      %p117 = por %p115, %p116
      %s118 = ssub.s32 %s16, %s35
      %s119 = ssub.s32 %s17, %s31
      %s120 = sor.u32 %s118, %s119
      %p121 = scmp.eq.s32.totalorder %s120, 0
      %s123 = sadd.s32 %s122, 1
      %s124 = scalar_select %p121, %s122, %s123
      %p127 = pneg %p121
      %p128 = scmp.eq.s32.totalorder %s9, 1
      %p129 = por %p127, %p128
      %p130 = scmp.ne.s32.totalorder %s122, %s125
      %p131 = scmp.eq.s32.totalorder %s9, 0
      %p132 = por %p130, %p131
      %p133 = scmp.ne.s32.totalorder %s122, %s125
      %p134 = scmp.eq.s32.totalorder %s14, 1
      %p135 = por %p133, %p134
      %p136 = scmp.ne.s32.totalorder %s125, %s126
      %p137 = scmp.eq.s32.totalorder %s14, 0
      %p138 = por %p136, %p137
      %p139 = scmp.ne.s32.totalorder %s125, %s126
      %p140 = scmp.eq.s32.totalorder %s15, 1
      %p141 = por %p139, %p140
      %p143 = scmp.ne.s32.totalorder %s126, %s142
      %p144 = scmp.eq.s32.totalorder %s15, 0
      %p145 = por %p143, %p144
      %p146 = scmp.le.s32.totalorder 1, %s9
      %p147 = scmp.lt.s32.totalorder %s9, 3
      %p148 = pnand %p146, %p147
      %p149 = pneg %p148
      // Predicated region
      $region9: #{conv1d_forward.1} parent=5 // pred_check
        _
      $region10: #{conv1d_forward.1} parent=5 // pred_check_branch
        %151 = sbr.rel (%p148) target = $region12
      $region11: #{conv1d_forward.1} parent=5 // pred_region
        %s152 = ssub.s32 %s9, 1
        // Predicated region
        $region13: #{conv1d_forward.1} parent=11 // pred_check
          %p153 = pneg %p56
        $region14: #{conv1d_forward.1} parent=11 // pred_check_branch
          %155 = sbr.rel (%p153) target = $region16
        $region15: #{conv1d_forward.1} parent=11 // pred_region
          %s156 = smul.u32 2, %s19
          %p157 = scmp.lt.s32.totalorder %s156, 1
          %s158 = scalar_select %p157, %s156, 1
          %p159 = scmp.lt.s32.totalorder %s21, 0
          %s160 = scalar_select %p159, %s21, 0
          %s161 = sadd.s32 %s160, %s158
          %s162 = smul.addr %s161, 8
          %s163 = scalar_lea.vmem %s0, %s162
          %s164 = smul.u32 2, %s19
        $region16: #{conv1d_forward.1} parent=11 // pred_fallthru
          _
      $region12: #{conv1d_forward.1} parent=5 // pred_fallthru
        _
      %p165 = scmp.lt.s32.totalorder %s9, 2
      // Predicated region
      $region17: #{conv1d_forward.1} parent=5 // pred_check
        %p166 = pneg %p165
      $region18: #{conv1d_forward.1} parent=5 // pred_check_branch
        %168 = sbr.rel (%p166) target = $region20
      $region19: #{conv1d_forward.1} parent=5 // pred_region
        // Predicated region
        $region21: #{conv1d_forward.1} parent=19 // pred_check
          %p169 = pneg %p78
        $region22: #{conv1d_forward.1} parent=19 // pred_check_branch
          %171 = sbr.rel (%p169) target = $region24
        $region23: #{conv1d_forward.1} parent=19 // pred_region
          %s172 = sand.u32 %s68, 1
          %s173 = sand.u32 %s68, 1
          %s174 = smul.addr %s173, 256
          %s175 = scalar_lea.vmem [#allocation3], %s174
          %s176 = smul.u32 16, %s18
          %s177 = smul.u32 2, %s17
          %s178 = smul.addr %s176, 4
          %s179 = sadd.s32 %s177, %s178
          %s180 = smul.addr %s179, 8
          %s181 = scalar_lea.vmem %s1, %s180
          // Predicated region
          $region25: #{conv1d_forward.1} parent=23 // pred_check
            _
          $region26: #{conv1d_forward.1} parent=23 // pred_check_branch
            %183 = sbr.rel (0) target = $region28
          $region27: #{conv1d_forward.1} parent=23 // pred_region
            // Predicated region
            $region29: #{conv1d_forward.1} parent=27 // pred_check
              _
            $region30: #{conv1d_forward.1} parent=27 // pred_check_branch
              %185 = sbr.rel (0) target = $region32
            $region31: #{conv1d_forward.1} parent=27 // pred_region
              loop: start=0, step=1, limit=1
              $region33: #{conv1d_forward.1} parent=31 // loop_pre_header
                _
              $region34: #{conv1d_forward.1} parent=31 // loop_header
                %s187 = sphi 0, %s191
                %p188 = scmp.ge.s32.totalorder %s187, 1
                %s192 = sphi %s181, %s181
                %s193 = sphi %s175, %s175
              $region35: #{conv1d_forward.1} parent=31 // loop_header_branch
                %190 = sbr.rel (%p188) target = $region39
              $region36: #{conv1d_forward.1} parent=31 // loop_body
                %v194 = vld [vmem:[%s192] sm:$0xff]
                %195 = vst [vmem:[%s193] sm:$0xff] %v194
                %v196 = vld [vmem:[%s192 + $0x8] sm:$0xff]
                %197 = vst [vmem:[%s193 + $0x8] sm:$0xff] %v196
                %v198 = vld [vmem:[%s192 + $0x20] sm:$0xff]
                %199 = vst [vmem:[%s193 + $0x10] sm:$0xff] %v198
                %v200 = vld [vmem:[%s192 + $0x28] sm:$0xff]
                %201 = vst [vmem:[%s193 + $0x18] sm:$0xff] %v200
                %v202 = vld [vmem:[%s192 + $0x40] sm:$0xff]
                %203 = vst [vmem:[%s193 + $0x20] sm:$0xff] %v202
                %v204 = vld [vmem:[%s192 + $0x48] sm:$0xff]
                %205 = vst [vmem:[%s193 + $0x28] sm:$0xff] %v204
                %v206 = vld [vmem:[%s192 + $0x60] sm:$0xff]
                %207 = vst [vmem:[%s193 + $0x30] sm:$0xff] %v206
                %v208 = vld [vmem:[%s192 + $0x68] sm:$0xff]
                %209 = vst [vmem:[%s193 + $0x38] sm:$0xff] %v208
                %v210 = vld [vmem:[%s192 + $0x80] sm:$0xff]
                %211 = vst [vmem:[%s193 + $0x40] sm:$0xff] %v210
                %v212 = vld [vmem:[%s192 + $0x88] sm:$0xff]
                %213 = vst [vmem:[%s193 + $0x48] sm:$0xff] %v212
                %v214 = vld [vmem:[%s192 + $0xa0] sm:$0xff]
                %215 = vst [vmem:[%s193 + $0x50] sm:$0xff] %v214
                %v216 = vld [vmem:[%s192 + $0xa8] sm:$0xff]
                %217 = vst [vmem:[%s193 + $0x58] sm:$0xff] %v216
                %v218 = vld [vmem:[%s192 + $0xc0] sm:$0xff]
                %219 = vst [vmem:[%s193 + $0x60] sm:$0xff] %v218
                %v220 = vld [vmem:[%s192 + $0xc8] sm:$0xff]
                %221 = vst [vmem:[%s193 + $0x68] sm:$0xff] %v220
                %v222 = vld [vmem:[%s192 + $0xe0] sm:$0xff]
                %223 = vst [vmem:[%s193 + $0x70] sm:$0xff] %v222
                %v224 = vld [vmem:[%s192 + $0xe8] sm:$0xff]
                %225 = vst [vmem:[%s193 + $0x78] sm:$0xff] %v224
                %v226 = vld [vmem:[%s192 + $0x100] sm:$0xff]
                %227 = vst [vmem:[%s193 + $0x80] sm:$0xff] %v226
                %v228 = vld [vmem:[%s192 + $0x108] sm:$0xff]
                %229 = vst [vmem:[%s193 + $0x88] sm:$0xff] %v228
                %v230 = vld [vmem:[%s192 + $0x120] sm:$0xff]
                %231 = vst [vmem:[%s193 + $0x90] sm:$0xff] %v230
                %v232 = vld [vmem:[%s192 + $0x128] sm:$0xff]
                %233 = vst [vmem:[%s193 + $0x98] sm:$0xff] %v232
                %v234 = vld [vmem:[%s192 + $0x140] sm:$0xff]
                %235 = vst [vmem:[%s193 + $0xa0] sm:$0xff] %v234
                %v236 = vld [vmem:[%s192 + $0x148] sm:$0xff]
                %237 = vst [vmem:[%s193 + $0xa8] sm:$0xff] %v236
                %v238 = vld [vmem:[%s192 + $0x160] sm:$0xff]
                %239 = vst [vmem:[%s193 + $0xb0] sm:$0xff] %v238
                %v240 = vld [vmem:[%s192 + $0x168] sm:$0xff]
                %241 = vst [vmem:[%s193 + $0xb8] sm:$0xff] %v240
                %v242 = vld [vmem:[%s192 + $0x180] sm:$0xff]
                %243 = vst [vmem:[%s193 + $0xc0] sm:$0xff] %v242
                %v244 = vld [vmem:[%s192 + $0x188] sm:$0xff]
                %245 = vst [vmem:[%s193 + $0xc8] sm:$0xff] %v244
                %v246 = vld [vmem:[%s192 + $0x1a0] sm:$0xff]
                %247 = vst [vmem:[%s193 + $0xd0] sm:$0xff] %v246
                %v248 = vld [vmem:[%s192 + $0x1a8] sm:$0xff]
                %249 = vst [vmem:[%s193 + $0xd8] sm:$0xff] %v248
                %v250 = vld [vmem:[%s192 + $0x1c0] sm:$0xff]
                %251 = vst [vmem:[%s193 + $0xe0] sm:$0xff] %v250
                %v252 = vld [vmem:[%s192 + $0x1c8] sm:$0xff]
                %253 = vst [vmem:[%s193 + $0xe8] sm:$0xff] %v252
                %v254 = vld [vmem:[%s192 + $0x1e0] sm:$0xff]
                %255 = vst [vmem:[%s193 + $0xf0] sm:$0xff] %v254
                %v256 = vld [vmem:[%s192 + $0x1e8] sm:$0xff]
                %257 = vst [vmem:[%s193 + $0xf8] sm:$0xff] %v256
              $region37: #{conv1d_forward.1} parent=31 // loop_footer
                %s191 = sadd.s32 1, %s187
              $region38: #{conv1d_forward.1} parent=31 // loop_footer_branch
                %186 = sbr.rel target = $region34
              $region39: #{conv1d_forward.1} parent=31 // loop_exit
                _
            $region32: #{conv1d_forward.1} parent=27 // pred_fallthru
              _
            // Predicated region
            $region40: #{conv1d_forward.1} parent=27 // pred_check
              _
            $region41: #{conv1d_forward.1} parent=27 // pred_check_branch
              %259 = sbr.rel target = $region43
            $region42: #{conv1d_forward.1} parent=27 // pred_region
              _
            $region43: #{conv1d_forward.1} parent=27 // pred_fallthru
              _
          $region28: #{conv1d_forward.1} parent=23 // pred_fallthru
            _
          %260 = vnop
        $region24: #{conv1d_forward.1} parent=19 // pred_fallthru
          _
        // Predicated region
        $region44: #{conv1d_forward.1} parent=19 // pred_check
          %p261 = pneg %p104
        $region45: #{conv1d_forward.1} parent=19 // pred_check_branch
          %263 = sbr.rel (%p261) target = $region47
        $region46: #{conv1d_forward.1} parent=19 // pred_region
          %s264 = smul.u32 2, %s17
          %p265 = scmp.lt.s32.totalorder %s264, 3
          %s266 = scalar_select %p265, %s264, 3
          %s267 = scalar_lea.vmem %s2, %s266
          %s268 = smul.u32 2, %s17
        $region47: #{conv1d_forward.1} parent=19 // pred_fallthru
          _
      $region20: #{conv1d_forward.1} parent=5 // pred_fallthru
        _
      %p269 = scmp.le.s32.totalorder 1, %s9
      %p270 = scmp.lt.s32.totalorder %s9, 3
      %p271 = pnand %p269, %p270
      %p272 = pneg %p271
      // Predicated region
      $region48: #{conv1d_forward.1} parent=5 // pred_check
        _
      $region49: #{conv1d_forward.1} parent=5 // pred_check_branch
        %274 = sbr.rel (%p271) target = $region51
      $region50: #{conv1d_forward.1} parent=5 // pred_region
        %s275 = ssub.s32 %s9, 1
        %s276 = sand.u32 %s71, 1
        %s277 = sand.u32 %s71, 1
        %s278 = smul.addr %s277, 256
        %s279 = scalar_lea.vmem [#allocation3], %s278
        // Predicated region
        $region52: #{conv1d_forward.1} parent=50 // pred_check
          %p280 = pneg %p84
        $region53: #{conv1d_forward.1} parent=50 // pred_check_branch
          %282 = sbr.rel (%p280) target = $region55
        $region54: #{conv1d_forward.1} parent=50 // pred_region
          _
        $region55: #{conv1d_forward.1} parent=50 // pred_fallthru
          _
        %s283 = smul.u32 2, %s19
        %p284 = scmp.lt.s32.totalorder %s283, 1
        %s285 = scalar_select %p284, %s283, 1
        %p286 = scmp.lt.s32.totalorder %s21, 0
        %s287 = scalar_select %p286, %s21, 0
        %s288 = sadd.s32 %s287, %s285
        %s289 = smul.addr %s288, 8
        %s290 = scalar_lea.vmem %s0, %s289
        %p291 = pneg %p56
        %p292 = pneg %p53
        %s293 = sand.u32 %s71, 1
        %s294 = sand.u32 %s71, 1
        %s295 = smul.addr %s294, 256
        %s296 = scalar_lea.vmem [#allocation3], %s295
        %p297 = pneg %p84
        %p298 = pneg %p81
        %s299 = smul.u32 2, %s20
        %p300 = scmp.lt.s32.totalorder %s299, 3
        %s301 = scalar_select %p300, %s299, 3
        %s302 = scalar_lea.vmem %s2, %s301
        %p303 = pneg %p110
        %p304 = pneg %p107
        %p305 = pneg %p138
        %p306 = pneg %p135
        %s307 = sand.u32 %s125, 1
        %s308 = sand.u32 %s125, 1
        %s309 = smul.addr %s308, 32
        %s310 = scalar_lea.vmem [#allocation4], %s309
        %s311 = smul.u32 2, %s19
        %p312 = scmp.lt.s32.totalorder %s311, 1
        %s313 = scalar_select %p312, %s311, 1
        %p314 = scmp.lt.s32.totalorder %s21, 0
        %s315 = scalar_select %p314, %s21, 0
        %s316 = sadd.s32 %s315, %s313
        %s317 = smul.addr %s316, 8
        %s318 = scalar_lea.vmem %s0, %s317
        %s319 = smul.u32 2, %s19
        %s320 = smul.u32 16, %s21
        %s321 = smul.u32 2, %s20
        %s322 = smul.u32 2, %s20
        %p323 = scmp.lt.s32.totalorder %s322, 3
        %s324 = scalar_select %p323, %s322, 3
        %s325 = scalar_lea.vmem %s2, %s324
        %s326 = smul.u32 2, %s20
        %s327 = smul.u32 2, %s19
        %s328 = smul.u32 2, %s20
        %p329 = scmp.eq.s32.totalorder %s21, 0
        // Predicated region
        $region56: #{conv1d_forward.1} parent=50 // pred_check
          %p330 = pneg %p329
        $region57: #{conv1d_forward.1} parent=50 // pred_check_branch
          %332 = sbr.rel (%p330) target = $region59
        $region58: #{conv1d_forward.1} parent=50 // pred_region
          %333 = vst [vmem:[#allocation2] sm:$0xff] 0.0
          %334 = vst [vmem:[#allocation2 + $0x8] sm:$0xff] 0.0
          %335 = vst [vmem:[#allocation2 + $0x10] sm:$0xff] 0.0
          %336 = vst [vmem:[#allocation2 + $0x18] sm:$0xff] 0.0
        $region59: #{conv1d_forward.1} parent=50 // pred_fallthru
          _
        %v337 = vld [vmem:[#allocation2] sm:$0xff]
        %v338 = vld [vmem:[#allocation2 + $0x8] sm:$0xff]
        %v339 = vld [vmem:[#allocation2 + $0x10] sm:$0xff]
        %v340 = vld [vmem:[#allocation2 + $0x18] sm:$0xff]
        %v341 = vld [vmem:[%s318] sm:$0xff]
        %v342 = vld [vmem:[%s318 + $0x8] sm:$0xff]
        %v343 = vld [vmem:[%s279] sm:$0xff]
        %v344 = vld [vmem:[%s279 + $0x8] sm:$0xff]
        %v345 = vld [vmem:[%s279 + $0x10] sm:$0xff]
        %v346 = vld [vmem:[%s279 + $0x18] sm:$0xff]
        %v347 = vld [vmem:[%s279 + $0x20] sm:$0xff]
        %v348 = vld [vmem:[%s279 + $0x28] sm:$0xff]
        %v349 = vld [vmem:[%s279 + $0x30] sm:$0xff]
        %v350 = vld [vmem:[%s279 + $0x38] sm:$0xff]
        %v351 = vld [vmem:[%s279 + $0x40] sm:$0xff]
        %v352 = vld [vmem:[%s279 + $0x48] sm:$0xff]
        %v353 = vld [vmem:[%s279 + $0x50] sm:$0xff]
        %v354 = vld [vmem:[%s279 + $0x58] sm:$0xff]
        %v355 = vld [vmem:[%s279 + $0x60] sm:$0xff]
        %v356 = vld [vmem:[%s279 + $0x68] sm:$0xff]
        %v357 = vld [vmem:[%s279 + $0x70] sm:$0xff]
        %v358 = vld [vmem:[%s279 + $0x78] sm:$0xff]
        %v359 = vld [vmem:[%s279 + $0x80] sm:$0xff]
        %v360 = vld [vmem:[%s279 + $0x88] sm:$0xff]
        %v361 = vld [vmem:[%s279 + $0x90] sm:$0xff]
        %v362 = vld [vmem:[%s279 + $0x98] sm:$0xff]
        %v363 = vld [vmem:[%s279 + $0xa0] sm:$0xff]
        %v364 = vld [vmem:[%s279 + $0xa8] sm:$0xff]
        %v365 = vld [vmem:[%s279 + $0xb0] sm:$0xff]
        %v366 = vld [vmem:[%s279 + $0xb8] sm:$0xff]
        %v367 = vld [vmem:[%s279 + $0xc0] sm:$0xff]
        %v368 = vld [vmem:[%s279 + $0xc8] sm:$0xff]
        %v369 = vld [vmem:[%s279 + $0xd0] sm:$0xff]
        %v370 = vld [vmem:[%s279 + $0xd8] sm:$0xff]
        %v371 = vld [vmem:[%s279 + $0xe0] sm:$0xff]
        %v372 = vld [vmem:[%s279 + $0xe8] sm:$0xff]
        %v373 = vld [vmem:[%s279 + $0xf0] sm:$0xff]
        %v374 = vld [vmem:[%s279 + $0xf8] sm:$0xff]
        %375 = vmatpush.msra.mxu0 %v373
        %376 = vmatpush.msra.mxu0 %v371
        %377 = vmatpush.msra.mxu0 %v369
        %378 = vmatpush.msra.mxu0 %v367
        %379 = vmatpush.msra.mxu0 %v365
        %380 = vmatpush.msra.mxu0 %v363
        %381 = vmatpush.msra.mxu0 %v361
        %382 = vmatpush.msra.mxu0 %v359
        %383 = vmatpush.msra.mxu0 %v357
        %384 = vmatpush.msra.mxu0 %v355
        %385 = vmatpush.msra.mxu0 %v353
        %386 = vmatpush.msra.mxu0 %v351
        %387 = vmatpush.msra.mxu0 %v349
        %388 = vmatpush.msra.mxu0 %v347
        %389 = vmatpush.msra.mxu0 %v345
        %390 = vmatpush.msra.mxu0 %v343
        %391 = vmatmul.f32.gmra.mxu0 %v341
        %v392 = vpop.f32.mrf.mxu0
        %v393 = vadd.f32 0.0, %v392
        %394 = vmatmul.f32.gmra.mxu0 %v342
        %v395 = vpop.f32.mrf.mxu0
        %v396 = vadd.f32 0.0, %v395
        %397 = vdwg.mxu0
        %398 = vmatpush.msra.mxu0 %v374
        %399 = vmatpush.msra.mxu0 %v372
        %400 = vmatpush.msra.mxu0 %v370
        %401 = vmatpush.msra.mxu0 %v368
        %402 = vmatpush.msra.mxu0 %v366
        %403 = vmatpush.msra.mxu0 %v364
        %404 = vmatpush.msra.mxu0 %v362
        %405 = vmatpush.msra.mxu0 %v360
        %406 = vmatpush.msra.mxu0 %v358
        %407 = vmatpush.msra.mxu0 %v356
        %408 = vmatpush.msra.mxu0 %v354
        %409 = vmatpush.msra.mxu0 %v352
        %410 = vmatpush.msra.mxu0 %v350
        %411 = vmatpush.msra.mxu0 %v348
        %412 = vmatpush.msra.mxu0 %v346
        %413 = vmatpush.msra.mxu0 %v344
        %414 = vmatmul.f32.gmra.mxu0 %v341
        %v415 = vpop.f32.mrf.mxu0
        %v416 = vadd.f32 0.0, %v415
        %417 = vmatmul.f32.gmra.mxu0 %v342
        %v418 = vpop.f32.mrf.mxu0
        %v419 = vadd.f32 0.0, %v418
        %420 = vdwg.mxu0
        %v421 = vadd.f32 %v337, %v393
        %v422 = vadd.f32 %v338, %v416
        %v423 = vadd.f32 %v339, %v396
        %v424 = vadd.f32 %v340, %v419
        %425 = vst [vmem:[#allocation2] sm:$0xff] %v421
        %426 = vst [vmem:[#allocation2 + $0x8] sm:$0xff] %v422
        %427 = vst [vmem:[#allocation2 + $0x10] sm:$0xff] %v423
        %428 = vst [vmem:[#allocation2 + $0x18] sm:$0xff] %v424
        // Predicated region
        $region60: #{conv1d_forward.1} parent=50 // pred_check
          %p429 = pneg %p329
        $region61: #{conv1d_forward.1} parent=50 // pred_check_branch
          %431 = sbr.rel (%p429) target = $region63
        $region62: #{conv1d_forward.1} parent=50 // pred_region
          %v432 = vld [vmem:[#allocation2] sm:$0xff]
          %v433 = vld [vmem:[#allocation2 + $0x8] sm:$0xff]
          %v434 = vld [vmem:[#allocation2 + $0x10] sm:$0xff]
          %v435 = vld [vmem:[#allocation2 + $0x18] sm:$0xff]
          %v436 = vld [vmem:[%s325] sm:$0x3]
          %v438 = vperm.slane %v436, 0
          %v439 = vperm.slane %v436, 1
          %v442 = vadd.f32 %v432, %v438
          %v443 = vadd.f32 %v433, %v439
          %v444 = vadd.f32 %v434, %v438
          %v445 = vadd.f32 %v435, %v439
          %446 = vst [vmem:[%s310] sm:$0xff] %v442
          %447 = vst [vmem:[%s310 + $0x8] sm:$0xff] %v443
          %448 = vst [vmem:[%s310 + $0x10] sm:$0xff] %v444
          %449 = vst [vmem:[%s310 + $0x18] sm:$0xff] %v445
        $region63: #{conv1d_forward.1} parent=50 // pred_fallthru
          _
        %s450 = sand.u32 %s125, 1
        %s451 = sand.u32 %s125, 1
        %s452 = smul.addr %s451, 32
        %s453 = scalar_lea.vmem [#allocation4], %s452
        // Predicated region
        $region64: #{conv1d_forward.1} parent=50 // pred_check
          %p454 = pneg %p135
        $region65: #{conv1d_forward.1} parent=50 // pred_check_branch
          %456 = sbr.rel (%p454) target = $region67
        $region66: #{conv1d_forward.1} parent=50 // pred_region
          %s457 = smul.u32 2, %s19
          %s458 = smul.u32 2, %s20
          %s459 = smul.addr %s457, 4
          %s460 = sadd.s32 %s458, %s459
          %s461 = smul.addr %s460, 8
          %s462 = scalar_lea.vmem %s3, %s461
          // Predicated region
          $region68: #{conv1d_forward.1} parent=66 // pred_check
            _
          $region69: #{conv1d_forward.1} parent=66 // pred_check_branch
            %464 = sbr.rel (0) target = $region71
          $region70: #{conv1d_forward.1} parent=66 // pred_region
            // Predicated region
            $region72: #{conv1d_forward.1} parent=70 // pred_check
              _
            $region73: #{conv1d_forward.1} parent=70 // pred_check_branch
              %466 = sbr.rel (0) target = $region75
            $region74: #{conv1d_forward.1} parent=70 // pred_region
              loop: start=0, step=1, limit=1
              $region76: #{conv1d_forward.1} parent=74 // loop_pre_header
                _
              $region77: #{conv1d_forward.1} parent=74 // loop_header
                %s468 = sphi 0, %s472
                %p469 = scmp.ge.s32.totalorder %s468, 1
                %s473 = sphi %s453, %s453
                %s474 = sphi %s462, %s462
              $region78: #{conv1d_forward.1} parent=74 // loop_header_branch
                %471 = sbr.rel (%p469) target = $region82
              $region79: #{conv1d_forward.1} parent=74 // loop_body
                %v475 = vld [vmem:[%s473] sm:$0xff]
                %476 = vst [vmem:[%s474] sm:$0xff] %v475
                %v477 = vld [vmem:[%s473 + $0x8] sm:$0xff]
                %478 = vst [vmem:[%s474 + $0x8] sm:$0xff] %v477
                %v479 = vld [vmem:[%s473 + $0x10] sm:$0xff]
                %480 = vst [vmem:[%s474 + $0x20] sm:$0xff] %v479
                %v481 = vld [vmem:[%s473 + $0x18] sm:$0xff]
                %482 = vst [vmem:[%s474 + $0x28] sm:$0xff] %v481
              $region80: #{conv1d_forward.1} parent=74 // loop_footer
                %s472 = sadd.s32 1, %s468
              $region81: #{conv1d_forward.1} parent=74 // loop_footer_branch
                %467 = sbr.rel target = $region77
              $region82: #{conv1d_forward.1} parent=74 // loop_exit
                _
            $region75: #{conv1d_forward.1} parent=70 // pred_fallthru
              _
            // Predicated region
            $region83: #{conv1d_forward.1} parent=70 // pred_check
              _
            $region84: #{conv1d_forward.1} parent=70 // pred_check_branch
              %484 = sbr.rel target = $region86
            $region85: #{conv1d_forward.1} parent=70 // pred_region
              _
            $region86: #{conv1d_forward.1} parent=70 // pred_fallthru
              _
          $region71: #{conv1d_forward.1} parent=66 // pred_fallthru
            _
          %485 = vnop
        $region67: #{conv1d_forward.1} parent=50 // pred_fallthru
          _
      $region51: #{conv1d_forward.1} parent=5 // pred_fallthru
        _
      %p486 = scmp.le.s32.totalorder 2, %s9
      // Predicated region
      $region87: #{conv1d_forward.1} parent=5 // pred_check
        %p487 = pneg %p486
      $region88: #{conv1d_forward.1} parent=5 // pred_check_branch
        %489 = sbr.rel (%p487) target = $region90
      $region89: #{conv1d_forward.1} parent=5 // pred_region
        %s490 = ssub.s32 %s9, 2
        // Predicated region
        $region91: #{conv1d_forward.1} parent=89 // pred_check
          %p491 = pneg %p141
        $region92: #{conv1d_forward.1} parent=89 // pred_check_branch
          %493 = sbr.rel (%p491) target = $region94
        $region93: #{conv1d_forward.1} parent=89 // pred_region
          %s494 = sand.u32 %s126, 1
          %s495 = sand.u32 %s126, 1
          %s496 = smul.addr %s495, 32
          %s497 = scalar_lea.vmem [#allocation4], %s496
        $region94: #{conv1d_forward.1} parent=89 // pred_fallthru
          _
      $region90: #{conv1d_forward.1} parent=5 // pred_fallthru
        _
    $region6: #{conv1d_forward.1} parent=1 // loop_footer
      %s13 = sadd.s32 1, %s9
    $region7: #{conv1d_forward.1} parent=1 // loop_footer_branch
      %8 = sbr.rel target = $region3
    $region8: #{conv1d_forward.1} parent=1 // loop_exit
      _

</llo_original>
